<compile_context>
chip_gen: v7x
topology: tpu7x:2x2x1
jax: 0.10.0
libtpu: 0.0.40
codegen_flags: <defaults>
</compile_context>

<pallas_src>
import functools
import math

import jax
import jax.numpy as jnp
from jax.experimental import pallas as pl
from jax.experimental.pallas import tpu as pltpu


def _round_up(x, n):
    return ((x + n - 1) // n) * n


def _feature_resizer_kernel(x_ref, w_ref, p_ref, o_ref, *, c_out, do_ln):
    # x_ref: (tm, C_in)          native dtype (ragged last tile: extra rows are garbage)
    # w_ref: (C_in, C_out_p)     native dtype, pre-transposed, padded C_out cols are 0
    # p_ref: (4, C_out_p) f32    rows = [bias, gamma, beta, lane_mask]
    # o_ref: (tm, C_out_p)
    x = x_ref[...]
    w = w_ref[...]

    # Linear: canonical (M,K) x (K,N) feed into the MXU, f32 accumulation.
    y = jax.lax.dot_general(
        x, w,
        dimension_numbers=(((1,), (0,)), ((), ())),
        preferred_element_type=jnp.float32,
    )
    p = p_ref[...]
    y = y + p[0:1, :]  # padded bias entries are 0 -> padded y columns stay exactly 0

    if do_ln:
        # LayerNorm over the real C_out features, eps=1e-12, biased variance
        # (matches PyTorch nn.LayerNorm).
        inv_n = 1.0 / float(c_out)
        mean = jnp.sum(y, axis=-1, keepdims=True) * inv_n  # padded cols contribute 0
        yc = y - mean
        if y.shape[-1] != c_out:
            yc = yc * p[3:4, :]  # zero padded lanes before the variance reduction
        var = jnp.sum(yc * yc, axis=-1, keepdims=True) * inv_n
        y = yc * jax.lax.rsqrt(var + 1e-12)
        y = y * p[1:2, :] + p[2:3, :]

    # Dropout: identity at inference time.
    o_ref[...] = y.astype(o_ref.dtype)


def _vmem_limit_bytes():
    cap = None
    try:
        cap = getattr(pltpu.get_tpu_info(), "vmem_capacity_bytes", None)
    except Exception:
        cap = None
    if not cap:
        cap = 128 * 1024 * 1024
    # ~5/8 of physical VMEM (headroom for Mosaic scratch), never above 64 MiB:
    #   v5e/v6e (128 MiB) -> 64 MiB, v7x (64 MiB / TC) -> 40 MiB.
    return int(min(cap * 5 // 8, 64 * 1024 * 1024))


def _select_tile_m(m, c_in, c_out_p, x_itemsize, w_itemsize, out_itemsize,
                   vmem_limit, tile_m):
    if tile_m is None:
        # Reserve the resident weight (worst case double-buffered), packed params tile
        # and some Mosaic internal scratch, then budget the double-buffered x/out tiles
        # (plus per-row f32 intermediates) against the remaining VMEM.
        reserve = 2 * c_in * c_out_p * w_itemsize + 8 * c_out_p * 4 + (4 << 20)
        budget = max(vmem_limit - reserve, 4 << 20)
        per_row = 2 * (c_in * x_itemsize + c_out_p * out_itemsize) + 8 * c_out_p
        tile_m = max(64, min(512, budget // max(per_row, 1)))
    tile_m = int(tile_m)
    # Keep >=2 row tiles when there is enough work so a 2-TensorCore chip (v7x) can
    # shard the parallel row axis across both cores.
    if m >= 128:
        tile_m = min(tile_m, _round_up((m + 1) // 2, 8))
    if tile_m >= m:
        return m  # single full-extent block (legal even if m % 8 != 0)
    return max(8, _round_up(tile_m, 8))


def _build_resizer_call(kernel, m, c_in, c_out_p, tile_m, out_dtype,
                        vmem_limit, cost, invariant_mode):
    inv_kwargs = {} if invariant_mode is None else {"pipeline_mode": invariant_mode}
    grid = (pl.cdiv(m, tile_m),)
    return pl.pallas_call(
        kernel,
        out_shape=jax.ShapeDtypeStruct((m, c_out_p), out_dtype),
        grid_spec=pltpu.PrefetchScalarGridSpec(
            num_scalar_prefetch=0,
            grid=grid,
            in_specs=[
                # x rows: full (real) C_in as the last dim; last tile may be ragged.
                pl.BlockSpec((tile_m, c_in), lambda i: (i, 0)),
                # Pre-transposed weight: grid-invariant, stays resident in VMEM.
                pl.BlockSpec((c_in, c_out_p), lambda i: (0, 0), **inv_kwargs),
                # Packed [bias, gamma, beta, mask] f32: grid-invariant.
                pl.BlockSpec((4, c_out_p), lambda i: (0, 0), **inv_kwargs),
            ],
            out_specs=pl.BlockSpec((tile_m, c_out_p), lambda i: (i, 0)),
        ),
        compiler_params=pltpu.CompilerParams(
            dimension_semantics=("parallel",),
            vmem_limit_bytes=vmem_limit,
        ),
        cost_estimate=cost,
    )


def feature_resizer(encoder_features, weight, bias, ln_gamma=None, ln_beta=None,
                    *, do_ln=True, tile_m=None):
    """
    encoder_features: (..., C_in)
    weight:           (C_out, C_in)   -- PyTorch nn.Linear layout
    bias:             (C_out,)
    ln_gamma/ln_beta: (C_out,)
    returns:          (..., C_out)
    """
    *lead, c_in = encoder_features.shape
    c_out = weight.shape[0]
    out_dtype = encoder_features.dtype
    m = math.prod(lead) if lead else 1

    c_out_p = _round_up(c_out, 128)  # lane-dense output features

    # No copies of x: just a metadata reshape to 2-D.
    x2d = encoder_features.reshape(m, c_in)

    # One-time weight pad (zero C_out rows) + transpose to (C_in, C_out_p) so the kernel
    # contracts with a canonical (M,K) x (K,N) feed.
    if c_out_p != c_out:
        weight_t = jnp.pad(weight, ((0, c_out_p - c_out), (0, 0))).T
    else:
        weight_t = weight.T

    # Pack bias / gamma / beta / lane-mask into one (4, C_out_p) float32 operand.
    if ln_gamma is None:
        ln_gamma = jnp.ones((c_out,), jnp.float32)
    if ln_beta is None:
        ln_beta = jnp.zeros((c_out,), jnp.float32)

    def _pad1(v):
        v = v.astype(jnp.float32)
        return jnp.pad(v, (0, c_out_p - c_out)) if c_out_p != c_out else v

    lane_mask = (jnp.arange(c_out_p) < c_out).astype(jnp.float32)
    params = jnp.stack([_pad1(bias), _pad1(ln_gamma), _pad1(ln_beta), lane_mask], axis=0)

    x_itemsize = jnp.dtype(encoder_features.dtype).itemsize
    w_itemsize = jnp.dtype(weight_t.dtype).itemsize
    out_itemsize = jnp.dtype(out_dtype).itemsize

    vmem_limit = _vmem_limit_bytes()
    tile_m = _select_tile_m(m, c_in, c_out_p, x_itemsize, w_itemsize, out_itemsize,
                            vmem_limit, tile_m)

    cost = pl.CostEstimate(
        flops=2 * m * c_in * c_out_p,
        transcendentals=m,  # one rsqrt per row
        bytes_accessed=(
            m * c_in * x_itemsize
            + c_in * c_out_p * w_itemsize
            + 4 * c_out_p * 4
            + m * c_out_p * out_itemsize
        ),
    )

    kernel = functools.partial(_feature_resizer_kernel, c_out=c_out, do_ln=do_ln)

    try:
        # Single-buffer the grid-invariant operands (halves their VMEM footprint).
        out2d = _build_resizer_call(kernel, m, c_in, c_out_p, tile_m, out_dtype,
                                    vmem_limit, cost,
                                    invariant_mode=pl.Buffered(1))(x2d, weight_t, params)
    except Exception:
        # Fallback: some jax versions reject explicit single buffering.
        out2d = _build_resizer_call(kernel, m, c_in, c_out_p, tile_m, out_dtype,
                                    vmem_limit, cost,
                                    invariant_mode=None)(x2d, weight_t, params)

    if c_out_p != c_out:
        out2d = out2d[:, :c_out]
    return out2d.reshape(*lead, c_out)


if __name__ == "__main__":
    # Small, deterministic example: batch=2, seq=9, C_in=32 -> C_out=64.
    # tile_m=8 forces a multi-step grid with a ragged last row tile (m = 18).
    batch, seq, c_in, c_out = 2, 9, 32, 64
    key = jax.random.PRNGKey(0)
    kx, kw, kb, kg, kbe = jax.random.split(key, 5)

    x = jax.random.normal(kx, (batch, seq, c_in), dtype=jnp.float32)

    # nn.Linear(32, 64): weight (64, 32), bias (64,)
    weight = jax.random.normal(kw, (c_out, c_in), dtype=jnp.float32) * 0.05
    bias = jax.random.normal(kb, (c_out,), dtype=jnp.float32) * 0.05
    # nn.LayerNorm(64): gamma ~1, beta ~0 (slightly perturbed, deterministic)
    ln_gamma = jnp.ones((c_out,), dtype=jnp.float32) + 0.01 * jax.random.normal(kg, (c_out,))
    ln_beta = 0.01 * jax.random.normal(kbe, (c_out,), dtype=jnp.float32)

    out = feature_resizer(x, weight, bias, ln_gamma, ln_beta, tile_m=8)
    out = jax.block_until_ready(out)

    # Reference in plain JAX (same math as the PyTorch module in eval mode).
    y_ref = jnp.einsum("bsc,oc->bso", x, weight) + bias
    mu = jnp.mean(y_ref, axis=-1, keepdims=True)
    var = jnp.mean((y_ref - mu) ** 2, axis=-1, keepdims=True)
    y_ref = (y_ref - mu) / jnp.sqrt(var + 1e-12) * ln_gamma + ln_beta

    assert out.shape == (batch, seq, c_out)
    err = float(jnp.max(jnp.abs(out - y_ref)))
    assert jnp.allclose(out, y_ref, atol=1e-4, rtol=1e-4), err

    print("KERNEL_OK")
</pallas_src>

<mosaic_0001>
module attributes {stable_mosaic.version = 11 : i64} {
  func.func @_feature_resizer_kernel(%arg0: i32, %arg1: memref<8x32xf32, #tpu.memory_space<vmem>>, %arg2: memref<32x128xf32, #tpu.memory_space<vmem>>, %arg3: memref<4x128xf32, #tpu.memory_space<vmem>>, %arg4: memref<8x128xf32, #tpu.memory_space<vmem>>) attributes {dimension_semantics = [#tpu.dimension_semantics<parallel>], iteration_bounds = array<i64: 3>, scalar_prefetch = 0 : i64, scratch_operands = 0 : i64, tpu.core_type = #tpu.core_type<tc>, window_params = [{transform_indices = @transform_0, window_bounds = array<i64: 8, 32>}, {pipeline_mode = #tpu.pipeline_mode<synchronous>, transform_indices = @transform_1, window_bounds = array<i64: 32, 128>}, {pipeline_mode = #tpu.pipeline_mode<synchronous>, transform_indices = @transform_2, window_bounds = array<i64: 4, 128>}, {transform_indices = @transform_3, window_bounds = array<i64: 8, 128>}]} {
    %c0 = arith.constant 0 : index
    %c0_0 = arith.constant 0 : index
    %0 = vector.load %arg1[%c0, %c0_0] : memref<8x32xf32, #tpu.memory_space<vmem>>, vector<8x32xf32>
    %c0_1 = arith.constant 0 : index
    %c0_2 = arith.constant 0 : index
    %1 = vector.load %arg2[%c0_1, %c0_2] : memref<32x128xf32, #tpu.memory_space<vmem>>, vector<32x128xf32>
    %cst = arith.constant dense<0.000000e+00> : vector<8x128xf32>
    %2 = tpu.matmul %0, %1, %cst {dimension_numbers = #tpu.dot_dimension_numbers<[1], [0], [0], [1], [0, 0, 1, 1], [], []>} : vector<8x32xf32>, vector<32x128xf32>, vector<8x128xf32> -> vector<8x128xf32>
    %c0_3 = arith.constant 0 : index
    %c0_4 = arith.constant 0 : index
    %3 = vector.load %arg3[%c0_3, %c0_4] : memref<4x128xf32, #tpu.memory_space<vmem>>, vector<4x128xf32>
    %4 = vector.extract_strided_slice %3 {offsets = [0, 0], sizes = [1, 128], strides = [1, 1]} : vector<4x128xf32> to vector<1x128xf32>
    %5 = vector.broadcast %4 : vector<1x128xf32> to vector<8x128xf32>
    %6 = arith.addf %2, %5 : vector<8x128xf32>
    %cst_5 = arith.constant dense<0.000000e+00> : vector<8xf32>
    %7 = vector.multi_reduction <add>, %6, %cst_5 [1] : vector<8x128xf32> to vector<8xf32>
    %8 = vector.shape_cast %7 : vector<8xf32> to vector<8x1xf32>
    %cst_6 = arith.constant 1.562500e-02 : f32
    %9 = vector.broadcast %cst_6 : f32 to vector<8x1xf32>
    %10 = arith.mulf %8, %9 : vector<8x1xf32>
    %11 = vector.broadcast %10 : vector<8x1xf32> to vector<8x128xf32>
    %12 = arith.subf %6, %11 : vector<8x128xf32>
    %13 = vector.extract_strided_slice %3 {offsets = [3, 0], sizes = [1, 128], strides = [1, 1]} : vector<4x128xf32> to vector<1x128xf32>
    %14 = vector.broadcast %13 : vector<1x128xf32> to vector<8x128xf32>
    %15 = arith.mulf %12, %14 : vector<8x128xf32>
    %16 = arith.mulf %15, %15 : vector<8x128xf32>
    %cst_7 = arith.constant dense<0.000000e+00> : vector<8xf32>
    %17 = vector.multi_reduction <add>, %16, %cst_7 [1] : vector<8x128xf32> to vector<8xf32>
    %18 = vector.shape_cast %17 : vector<8xf32> to vector<8x1xf32>
    %cst_8 = arith.constant 1.562500e-02 : f32
    %19 = vector.broadcast %cst_8 : f32 to vector<8x1xf32>
    %20 = arith.mulf %18, %19 : vector<8x1xf32>
    %cst_9 = arith.constant 9.99999996E-13 : f32
    %21 = vector.broadcast %cst_9 : f32 to vector<8x1xf32>
    %22 = arith.addf %20, %21 : vector<8x1xf32>
    %23 = math.rsqrt %22 : vector<8x1xf32>
    %24 = vector.broadcast %23 : vector<8x1xf32> to vector<8x128xf32>
    %25 = arith.mulf %15, %24 : vector<8x128xf32>
    %26 = vector.extract_strided_slice %3 {offsets = [1, 0], sizes = [1, 128], strides = [1, 1]} : vector<4x128xf32> to vector<1x128xf32>
    %27 = vector.broadcast %26 : vector<1x128xf32> to vector<8x128xf32>
    %28 = arith.mulf %25, %27 : vector<8x128xf32>
    %29 = vector.extract_strided_slice %3 {offsets = [2, 0], sizes = [1, 128], strides = [1, 1]} : vector<4x128xf32> to vector<1x128xf32>
    %30 = vector.broadcast %29 : vector<1x128xf32> to vector<8x128xf32>
    %31 = arith.addf %28, %30 : vector<8x128xf32>
    %c0_10 = arith.constant 0 : index
    %c0_11 = arith.constant 0 : index
    %32 = vector.load %arg4[%c0_10, %c0_11] : memref<8x128xf32, #tpu.memory_space<vmem>>, vector<8x128xf32>
    tpu.vector_store %arg4[%c0_10, %c0_11], %31 {strides = array<i32>} : memref<8x128xf32, #tpu.memory_space<vmem>>, vector<8x128xf32>,
    return
  }
  func.func @transform_0(%arg0: i32) -> (i32, i32) {
    %c0_i32 = arith.constant 0 : i32
    %c0_i32_0 = arith.constant 0 : i32
    return %arg0, %c0_i32 : i32, i32
  }
  func.func @transform_1(%arg0: i32) -> (i32, i32) {
    %c0_i32 = arith.constant 0 : i32
    %c0_i32_0 = arith.constant 0 : i32
    %c0_i32_1 = arith.constant 0 : i32
    return %c0_i32, %c0_i32_0 : i32, i32
  }
  func.func @transform_2(%arg0: i32) -> (i32, i32) {
    %c0_i32 = arith.constant 0 : i32
    %c0_i32_0 = arith.constant 0 : i32
    %c0_i32_1 = arith.constant 0 : i32
    return %c0_i32, %c0_i32_0 : i32, i32
  }
  func.func @transform_3(%arg0: i32) -> (i32, i32) {
    %c0_i32 = arith.constant 0 : i32
    %c0_i32_0 = arith.constant 0 : i32
    return %arg0, %c0_i32 : i32, i32
  }
}

module attributes {stable_mosaic.version = 11 : i64} {
  func.func @_feature_resizer_kernel(%arg0: i32, %arg1: memref<8x32xf32, #tpu.memory_space<vmem>>, %arg2: memref<32x128xf32, #tpu.memory_space<vmem>>, %arg3: memref<4x128xf32, #tpu.memory_space<vmem>>, %arg4: memref<8x128xf32, #tpu.memory_space<vmem>>) attributes {dimension_semantics = [#tpu.dimension_semantics<parallel>], iteration_bounds = array<i64: 3>, scalar_prefetch = 0 : i64, scratch_operands = 0 : i64, tpu.core_type = #tpu.core_type<tc>, window_params = [{transform_indices = @transform_0, window_bounds = array<i64: 8, 32>}, {pipeline_mode = #tpu.pipeline_mode<synchronous>, transform_indices = @transform_1, window_bounds = array<i64: 32, 128>}, {pipeline_mode = #tpu.pipeline_mode<synchronous>, transform_indices = @transform_2, window_bounds = array<i64: 4, 128>}, {transform_indices = @transform_3, window_bounds = array<i64: 8, 128>}]} {
    %c0 = arith.constant 0 : index
    %c0_0 = arith.constant 0 : index
    %0 = vector.load %arg1[%c0, %c0_0] : memref<8x32xf32, #tpu.memory_space<vmem>>, vector<8x32xf32>
    %c0_1 = arith.constant 0 : index
    %c0_2 = arith.constant 0 : index
    %1 = vector.load %arg2[%c0_1, %c0_2] : memref<32x128xf32, #tpu.memory_space<vmem>>, vector<32x128xf32>
    %cst = arith.constant dense<0.000000e+00> : vector<8x128xf32>
    %2 = tpu.matmul %0, %1, %cst {dimension_numbers = #tpu.dot_dimension_numbers<[1], [0], [0], [1], [0, 0, 1, 1], [], []>} : vector<8x32xf32>, vector<32x128xf32>, vector<8x128xf32> -> vector<8x128xf32>
    %c0_3 = arith.constant 0 : index
    %c0_4 = arith.constant 0 : index
    %3 = vector.load %arg3[%c0_3, %c0_4] : memref<4x128xf32, #tpu.memory_space<vmem>>, vector<4x128xf32>
    %4 = vector.extract_strided_slice %3 {offsets = [0, 0], sizes = [1, 128], strides = [1, 1]} : vector<4x128xf32> to vector<1x128xf32>
    %5 = vector.broadcast %4 : vector<1x128xf32> to vector<8x128xf32>
    %6 = arith.addf %2, %5 : vector<8x128xf32>
    %cst_5 = arith.constant dense<0.000000e+00> : vector<8xf32>
    %7 = vector.multi_reduction <add>, %6, %cst_5 [1] : vector<8x128xf32> to vector<8xf32>
    %8 = vector.shape_cast %7 : vector<8xf32> to vector<8x1xf32>
    %cst_6 = arith.constant 1.562500e-02 : f32
    %9 = vector.broadcast %cst_6 : f32 to vector<8x1xf32>
    %10 = arith.mulf %8, %9 : vector<8x1xf32>
    %11 = vector.broadcast %10 : vector<8x1xf32> to vector<8x128xf32>
    %12 = arith.subf %6, %11 : vector<8x128xf32>
    %13 = vector.extract_strided_slice %3 {offsets = [3, 0], sizes = [1, 128], strides = [1, 1]} : vector<4x128xf32> to vector<1x128xf32>
    %14 = vector.broadcast %13 : vector<1x128xf32> to vector<8x128xf32>
    %15 = arith.mulf %12, %14 : vector<8x128xf32>
    %16 = arith.mulf %15, %15 : vector<8x128xf32>
    %cst_7 = arith.constant dense<0.000000e+00> : vector<8xf32>
    %17 = vector.multi_reduction <add>, %16, %cst_7 [1] : vector<8x128xf32> to vector<8xf32>
    %18 = vector.shape_cast %17 : vector<8xf32> to vector<8x1xf32>
    %cst_8 = arith.constant 1.562500e-02 : f32
    %19 = vector.broadcast %cst_8 : f32 to vector<8x1xf32>
    %20 = arith.mulf %18, %19 : vector<8x1xf32>
    %cst_9 = arith.constant 9.99999996E-13 : f32
    %21 = vector.broadcast %cst_9 : f32 to vector<8x1xf32>
    %22 = arith.addf %20, %21 : vector<8x1xf32>
    %23 = math.rsqrt %22 : vector<8x1xf32>
    %24 = vector.broadcast %23 : vector<8x1xf32> to vector<8x128xf32>
    %25 = arith.mulf %15, %24 : vector<8x128xf32>
    %26 = vector.extract_strided_slice %3 {offsets = [1, 0], sizes = [1, 128], strides = [1, 1]} : vector<4x128xf32> to vector<1x128xf32>
    %27 = vector.broadcast %26 : vector<1x128xf32> to vector<8x128xf32>
    %28 = arith.mulf %25, %27 : vector<8x128xf32>
    %29 = vector.extract_strided_slice %3 {offsets = [2, 0], sizes = [1, 128], strides = [1, 1]} : vector<4x128xf32> to vector<1x128xf32>
    %30 = vector.broadcast %29 : vector<1x128xf32> to vector<8x128xf32>
    %31 = arith.addf %28, %30 : vector<8x128xf32>
    %c0_10 = arith.constant 0 : index
    %c0_11 = arith.constant 0 : index
    %32 = vector.load %arg4[%c0_10, %c0_11] : memref<8x128xf32, #tpu.memory_space<vmem>>, vector<8x128xf32>
    tpu.vector_store %arg4[%c0_10, %c0_11], %31 {strides = array<i32>} : memref<8x128xf32, #tpu.memory_space<vmem>>, vector<8x128xf32>,
    return
  }
  func.func @transform_0(%arg0: i32) -> (i32, i32) {
    %c0_i32 = arith.constant 0 : i32
    %c0_i32_0 = arith.constant 0 : i32
    return %arg0, %c0_i32 : i32, i32
  }
  func.func @transform_1(%arg0: i32) -> (i32, i32) {
    %c0_i32 = arith.constant 0 : i32
    %c0_i32_0 = arith.constant 0 : i32
    %c0_i32_1 = arith.constant 0 : i32
    return %c0_i32, %c0_i32_0 : i32, i32
  }
  func.func @transform_2(%arg0: i32) -> (i32, i32) {
    %c0_i32 = arith.constant 0 : i32
    %c0_i32_0 = arith.constant 0 : i32
    %c0_i32_1 = arith.constant 0 : i32
    return %c0_i32, %c0_i32_0 : i32, i32
  }
  func.func @transform_3(%arg0: i32) -> (i32, i32) {
    %c0_i32 = arith.constant 0 : i32
    %c0_i32_0 = arith.constant 0 : i32
    return %arg0, %c0_i32 : i32, i32
  }
}

</mosaic_0001>

<llo_original>
// kernel: tpu_custom_call.1
$region0: #{tpu_custom_call.1}
  #allocation0 [shape = 'u32[]', space=smem, size = 0x4, offset = 0x4, fixed_abs, tag = 'smem constant byte address 0x4 - core index']
  #allocation1 [shape = 'u32[144,128]{1,0:T(1,128)}', space=vmem, size = 0x12000, scoped, tag = 'internal scratch']
  %s0 = inlined_call_operand.hbm [shape: f32[18,32], index: 0, kind: input, shape index: {}]
  %s1 = inlined_call_operand.hbm [shape: f32[32,128], index: 1, kind: input, shape index: {}]
  %s2 = inlined_call_operand.hbm [shape: f32[4,128], index: 2, kind: input, shape index: {}]
  %s3 = inlined_call_operand.hbm [shape: f32[18,128], index: 3, kind: output, shape index: {}]
  %s4 = sld [smem:[#allocation0]]
  $region57: #{tpu_custom_call.1} parent=0
    _
  %s6 = ssub.s32 1, %s4
  %s7 = scalar_select 0, %s6, %s4
  $region1: #{tpu_custom_call.1} parent=0
    #allocation2 [shape = 'u8[8192]{0}', space=vmem, size = 0x2000, scoped, tag = 'input window, operand 0']
    #allocation3 [shape = 's32[2]{0}', space=sflag, size = 0x8, scoped, tag = 'scoped memory for tpu_custom_call.1']
    #allocation4 [shape = 's32[2]{0}', space=sflag, size = 0x8, scoped, tag = 'scoped memory for tpu_custom_call.1']
    #allocation5 [shape = 'u8[16384]{0}', space=vmem, size = 0x4000, scoped, tag = 'input window, operand 1, single buffered']
    #allocation6 [shape = 's32[1]{0}', space=sflag, size = 0x4, scoped, tag = 'scoped memory for tpu_custom_call.1']
    #allocation7 [shape = 'u8[2048]{0}', space=vmem, size = 0x800, scoped, tag = 'input window, operand 2, single buffered']
    #allocation8 [shape = 'u8[8192]{0}', space=vmem, size = 0x2000, scoped, tag = 'output window, operand 0']
    %8 = vsyncpa [#allocation3], 0
    %s9 = scalar_lea.sflag [#allocation3], 1
    %10 = vsyncpa %s9, 0
    %11 = vsyncpa [#allocation6], 0
    %12 = vsyncpa [#allocation4], 0
    %s13 = scalar_lea.sflag [#allocation4], 1
    %14 = vsyncpa %s13, 0
    loop: start=0, step=1, limit=5
    $region2: #{tpu_custom_call.1} parent=1 // loop_pre_header
      _
    $region3: #{tpu_custom_call.1} parent=1 // loop_header
      %s16 = sphi 0, %s20
      %p17 = scmp.ge.s32.totalorder %s16, 5
      %s26 = sphi 0, %s28
      %s29 = sphi 0, %s26
      %s30 = sphi 0, %s29
      %s46 = sphi 0, %s30
      %s50 = sphi 0, %s50
      %s52 = sphi 0, %s50
      %s53 = sphi 0, %s52
      %s67 = sphi 0, %s53
      %s71 = sphi 0, %s71
      %s73 = sphi 0, %s71
      %s74 = sphi 0, %s73
      %s88 = sphi 0, %s74
      %s94 = sphi 0, %s96
      %s97 = sphi 0, %s94
      %s98 = sphi 0, %s97
      %s114 = sphi 0, %s98
    $region4: #{tpu_custom_call.1} parent=1 // loop_header_branch
      %19 = sbr.rel (%p17) target = $region8
    $region5: #{tpu_custom_call.1} parent=1 // loop_body
      %s21 = ssub.s32 %s16, 1
      %s22 = ssub.s32 %s16, 2
      %s23 = sadd.s32 %s16, 1
      %s24 = ssub.s32 %s16, %s23
      %p25 = scmp.eq.s32.totalorder %s24, 0
      %s27 = sadd.s32 %s26, 1
      %s28 = scalar_select %p25, %s26, %s27
      %p31 = pneg %p25
      %p32 = scmp.eq.s32.totalorder %s16, 2
      %p33 = por %p31, %p32
      %p34 = scmp.ne.s32.totalorder %s26, %s29
      %p35 = scmp.eq.s32.totalorder %s16, 0
      %p36 = por %p34, %p35
      %p37 = scmp.ne.s32.totalorder %s26, %s29
      %p38 = scmp.eq.s32.totalorder %s21, 2
      %p39 = por %p37, %p38
      %p40 = scmp.ne.s32.totalorder %s29, %s30
      %p41 = scmp.eq.s32.totalorder %s21, 0
      %p42 = por %p40, %p41
      %p43 = scmp.ne.s32.totalorder %s29, %s30
      %p44 = scmp.eq.s32.totalorder %s22, 2
      %p45 = por %p43, %p44
      %p47 = scmp.ne.s32.totalorder %s30, %s46
      %p48 = scmp.eq.s32.totalorder %s22, 0
      %p49 = por %p47, %p48
      %s51 = sadd.s32 %s50, 1
      %p54 = scmp.eq.s32.totalorder %s16, 2
      %p55 = scmp.ne.s32.totalorder %s50, %s52
      %p56 = scmp.eq.s32.totalorder %s16, 0
      %p57 = por %p55, %p56
      %p58 = scmp.ne.s32.totalorder %s50, %s52
      %p59 = scmp.eq.s32.totalorder %s21, 2
      %p60 = por %p58, %p59
      %p61 = scmp.ne.s32.totalorder %s52, %s53
      %p62 = scmp.eq.s32.totalorder %s21, 0
      %p63 = por %p61, %p62
      %p64 = scmp.ne.s32.totalorder %s52, %s53
      %p65 = scmp.eq.s32.totalorder %s22, 2
      %p66 = por %p64, %p65
      %p68 = scmp.ne.s32.totalorder %s53, %s67
      %p69 = scmp.eq.s32.totalorder %s22, 0
      %p70 = por %p68, %p69
      %s72 = sadd.s32 %s71, 1
      %p75 = scmp.eq.s32.totalorder %s16, 2
      %p76 = scmp.ne.s32.totalorder %s71, %s73
      %p77 = scmp.eq.s32.totalorder %s16, 0
      %p78 = por %p76, %p77
      %p79 = scmp.ne.s32.totalorder %s71, %s73
      %p80 = scmp.eq.s32.totalorder %s21, 2
      %p81 = por %p79, %p80
      %p82 = scmp.ne.s32.totalorder %s73, %s74
      %p83 = scmp.eq.s32.totalorder %s21, 0
      %p84 = por %p82, %p83
      %p85 = scmp.ne.s32.totalorder %s73, %s74
      %p86 = scmp.eq.s32.totalorder %s22, 2
      %p87 = por %p85, %p86
      %p89 = scmp.ne.s32.totalorder %s74, %s88
      %p90 = scmp.eq.s32.totalorder %s22, 0
      %p91 = por %p89, %p90
      %s92 = ssub.s32 %s16, %s23
      %p93 = scmp.eq.s32.totalorder %s92, 0
      %s95 = sadd.s32 %s94, 1
      %s96 = scalar_select %p93, %s94, %s95
      %p99 = pneg %p93
      %p100 = scmp.eq.s32.totalorder %s16, 2
      %p101 = por %p99, %p100
      %p102 = scmp.ne.s32.totalorder %s94, %s97
      %p103 = scmp.eq.s32.totalorder %s16, 0
      %p104 = por %p102, %p103
      %p105 = scmp.ne.s32.totalorder %s94, %s97
      %p106 = scmp.eq.s32.totalorder %s21, 2
      %p107 = por %p105, %p106
      %p108 = scmp.ne.s32.totalorder %s97, %s98
      %p109 = scmp.eq.s32.totalorder %s21, 0
      %p110 = por %p108, %p109
      %p111 = scmp.ne.s32.totalorder %s97, %s98
      %p112 = scmp.eq.s32.totalorder %s22, 2
      %p113 = por %p111, %p112
      %p115 = scmp.ne.s32.totalorder %s98, %s114
      %p116 = scmp.eq.s32.totalorder %s22, 0
      %p117 = por %p115, %p116
      %p118 = scmp.le.s32.totalorder 1, %s16
      %p119 = scmp.lt.s32.totalorder %s16, 4
      %p120 = pnand %p118, %p119
      %p121 = pneg %p120
      // Predicated region
      $region9: #{tpu_custom_call.1} parent=5 // pred_check
        _
      $region10: #{tpu_custom_call.1} parent=5 // pred_check_branch
        %123 = sbr.rel (%p120) target = $region12
      $region11: #{tpu_custom_call.1} parent=5 // pred_region
        %s124 = ssub.s32 %s16, 1
        // Predicated region
        $region13: #{tpu_custom_call.1} parent=11 // pred_check
          %p125 = pneg %p63
        $region14: #{tpu_custom_call.1} parent=11 // pred_check_branch
          %127 = sbr.rel (%p125) target = $region16
        $region15: #{tpu_custom_call.1} parent=11 // pred_region
          %s129 = ssub.s32 512, 512
          %130 = vsyncadd [#allocation6], %s129
          %s131 = sshll.u32 [#allocation5], 4
          %s132 = int_to_ptr.vmem [resolvable:$true] %s131
          %137 = dma.hbm_to_vmem [thread:$0]  %s1, 512, %s132, [#allocation6], 128, 128, 8
        $region16: #{tpu_custom_call.1} parent=11 // pred_fallthru
          _
        // Predicated region
        $region17: #{tpu_custom_call.1} parent=11 // pred_check
          %p138 = pneg %p84
        $region18: #{tpu_custom_call.1} parent=11 // pred_check_branch
          %140 = sbr.rel (%p138) target = $region20
        $region19: #{tpu_custom_call.1} parent=11 // pred_region
          %s142 = ssub.s32 64, 64
          %143 = vsyncadd [#allocation6], %s142
          %s145 = sshll.u32 [#allocation7], 4
          %s146 = int_to_ptr.vmem [resolvable:$true] %s145
          %148 = dma.hbm_to_vmem [thread:$0]  %s2, 64, %s146, [#allocation6]
        $region20: #{tpu_custom_call.1} parent=11 // pred_fallthru
          _
      $region12: #{tpu_custom_call.1} parent=5 // pred_fallthru
        _
      %p149 = scmp.lt.s32.totalorder %s16, 3
      // Predicated region
      $region21: #{tpu_custom_call.1} parent=5 // pred_check
        %p150 = pneg %p149
      $region22: #{tpu_custom_call.1} parent=5 // pred_check_branch
        %152 = sbr.rel (%p150) target = $region24
      $region23: #{tpu_custom_call.1} parent=5 // pred_region
        // Predicated region
        $region25: #{tpu_custom_call.1} parent=23 // pred_check
          %p153 = pneg %p36
        $region26: #{tpu_custom_call.1} parent=23 // pred_check_branch
          %155 = sbr.rel (%p153) target = $region28
        $region27: #{tpu_custom_call.1} parent=23 // pred_region
          %s156 = sand.u32 %s26, 1
          %s157 = scalar_lea.sflag [#allocation3], %s156
          %s158 = sand.u32 %s26, 1
          %s159 = smul.addr %s158, 8
          %s160 = scalar_lea.vmem [#allocation2], %s159
          %s162 = ssub.s32 128, 128
          %163 = vsyncadd %s157, %s162
          %s164 = smul.addr %s16, 128
          %s165 = scalar_lea.hbm %s0, %s164
          %s167 = sshll.u32 %s160, 4
          %s168 = int_to_ptr.vmem [resolvable:$true] %s167
          %170 = dma.hbm_to_vmem [thread:$0]  %s165, 128, %s168, %s157
        $region28: #{tpu_custom_call.1} parent=23 // pred_fallthru
          _
      $region24: #{tpu_custom_call.1} parent=5 // pred_fallthru
        _
      %p171 = scmp.le.s32.totalorder 1, %s16
      %p172 = scmp.lt.s32.totalorder %s16, 4
      %p173 = pnand %p171, %p172
      %p174 = pneg %p173
      // Predicated region
      $region29: #{tpu_custom_call.1} parent=5 // pred_check
        _
      $region30: #{tpu_custom_call.1} parent=5 // pred_check_branch
        %176 = sbr.rel (%p173) target = $region32
      $region31: #{tpu_custom_call.1} parent=5 // pred_region
        %s177 = ssub.s32 %s16, 1
        %s178 = sand.u32 %s29, 1
        %s179 = scalar_lea.sflag [#allocation3], %s178
        %s180 = sand.u32 %s29, 1
        %s181 = smul.addr %s180, 8
        %s182 = scalar_lea.vmem [#allocation2], %s181
        // Predicated region
        $region33: #{tpu_custom_call.1} parent=31 // pred_check
          %p183 = pneg %p42
        $region34: #{tpu_custom_call.1} parent=31 // pred_check_branch
          %185 = sbr.rel (%p183) target = $region36
        $region35: #{tpu_custom_call.1} parent=31 // pred_region
          %186 = dma.done %s179, 128
        $region36: #{tpu_custom_call.1} parent=31 // pred_fallthru
          _
        // Predicated region
        $region37: #{tpu_custom_call.1} parent=31 // pred_check
          %p187 = pneg %p63
        $region38: #{tpu_custom_call.1} parent=31 // pred_check_branch
          %189 = sbr.rel (%p187) target = $region40
        $region39: #{tpu_custom_call.1} parent=31 // pred_region
          %190 = dma.done [#allocation6], 512
        $region40: #{tpu_custom_call.1} parent=31 // pred_fallthru
          _
        // Predicated region
        $region41: #{tpu_custom_call.1} parent=31 // pred_check
          %p191 = pneg %p84
        $region42: #{tpu_custom_call.1} parent=31 // pred_check_branch
          %193 = sbr.rel (%p191) target = $region44
        $region43: #{tpu_custom_call.1} parent=31 // pred_region
          %194 = dma.done [#allocation6], 64
        $region44: #{tpu_custom_call.1} parent=31 // pred_fallthru
          _
        %s195 = sand.u32 %s29, 1
        %s196 = scalar_lea.sflag [#allocation3], %s195
        %s197 = sand.u32 %s29, 1
        %s198 = smul.addr %s197, 8
        %s199 = scalar_lea.vmem [#allocation2], %s198
        %p200 = pneg %p42
        %p201 = pneg %p39
        %p202 = pneg %p63
        %p203 = pneg %p60
        %p204 = pneg %p84
        %p205 = pneg %p81
        %p206 = pneg %p110
        %p207 = pneg %p107
        %s208 = sand.u32 %s97, 1
        %s209 = scalar_lea.sflag [#allocation4], %s208
        %s210 = sand.u32 %s97, 1
        %s211 = smul.addr %s210, 8
        %s212 = scalar_lea.vmem [#allocation8], %s211
        %v213 = vld [vmem:[%s182] sm:$0xff]
        %v214 = vld [vmem:[#allocation5] sm:$0xff]
        %v215 = vld [vmem:[#allocation5 + $0x8] sm:$0xff]
        %v216 = vld [vmem:[#allocation5 + $0x10] sm:$0xff]
        %v217 = vld [vmem:[#allocation5 + $0x18] sm:$0xff]
        %v218 = vld [vmem:[#allocation7] sm:$0xf]
        %v219 = vlaneseq
        %v220 = vshrl.u32 %v219, 7
        %v221 = vsub.s32 0, %v220
        %v222 = vrot.slane %v218, %v221
        %vm223 = vcmask 261120
        %v225 = vsel %vm223, %v213, 0
        %227 = vmatprep.subr.mxu0 0.0
        %228 = vmatpush1.msra.mxu0 %v214
        %229 = vmatprep.subr.mxu0 0.0
        %230 = vmatpush1.msra.mxu0 %v215
        %231 = vmatprep.subr.mxu0 0.0
        %232 = vmatpush1.msra.mxu0 %v216
        %233 = vmatprep.subr.mxu0 0.0
        %234 = vmatpush1.msra.mxu0 %v217
        %235 = vmatprep.subr.mxu0 0.0
        %236 = vmatpush1.msra.mxu0 0.0
        %237 = vmatprep.subr.mxu0 0.0
        %238 = vmatpush1.msra.mxu0 0.0
        %239 = vmatprep.subr.mxu0 0.0
        %240 = vmatpush1.msra.mxu0 0.0
        %241 = vmatprep.subr.mxu0 0.0
        %242 = vmatpush1.msra.mxu0 0.0
        %243 = vmatprep.subr.mxu0 0.0
        %244 = vmatpush1.msra.mxu0 0.0
        %245 = vmatprep.subr.mxu0 0.0
        %246 = vmatpush1.msra.mxu0 0.0
        %247 = vmatprep.subr.mxu0 0.0
        %248 = vmatpush1.msra.mxu0 0.0
        %249 = vmatprep.subr.mxu0 0.0
        %250 = vmatpush1.msra.mxu0 0.0
        %251 = vmatprep.subr.mxu0 0.0
        %252 = vmatpush1.msra.mxu0 0.0
        %253 = vmatprep.subr.mxu0 0.0
        %254 = vmatpush1.msra.mxu0 0.0
        %255 = vmatprep.subr.mxu0 0.0
        %256 = vmatpush1.msra.mxu0 0.0
        %257 = vmatprep.subr.mxu0 0.0
        %258 = vmatpush1.msra.mxu0 0.0
        %259 = vmatprep.subr.mxu0 0.0
        %260 = vmatpush1.msra.mxu0 0.0
        %261 = vmatprep.subr.mxu0 0.0
        %262 = vmatpush1.msra.mxu0 0.0
        %263 = vmatprep.subr.mxu0 0.0
        %264 = vmatpush1.msra.mxu0 0.0
        %265 = vmatprep.subr.mxu0 0.0
        %266 = vmatpush1.msra.mxu0 0.0
        %267 = vmatprep.subr.mxu0 0.0
        %268 = vmatpush1.msra.mxu0 0.0
        %269 = vmatprep.subr.mxu0 0.0
        %270 = vmatpush1.msra.mxu0 0.0
        %271 = vmatprep.subr.mxu0 0.0
        %272 = vmatpush1.msra.mxu0 0.0
        %273 = vmatprep.subr.mxu0 0.0
        %274 = vmatpush1.msra.mxu0 0.0
        %275 = vmatprep.subr.mxu0 0.0
        %276 = vmatpush1.msra.mxu0 0.0
        %277 = vmatprep.subr.mxu0 0.0
        %278 = vmatpush1.msra.mxu0 0.0
        %279 = vmatprep.subr.mxu0 0.0
        %280 = vmatpush1.msra.mxu0 0.0
        %281 = vmatprep.subr.mxu0 0.0
        %282 = vmatpush1.msra.mxu0 0.0
        %283 = vmatprep.subr.mxu0 0.0
        %284 = vmatpush1.msra.mxu0 0.0
        %285 = vmatprep.subr.mxu0 0.0
        %286 = vmatpush1.msra.mxu0 0.0
        %287 = vmatprep.subr.mxu0 0.0
        %288 = vmatpush1.msra.mxu0 0.0
        %289 = vmatprep.subr.mxu0 0.0
        %290 = vmatpush1.msra.mxu0 0.0
        %291 = vmatprep.mubr.f32.mxu0 0.0
        %292 = vmatmul.mubr.f32.gmra.mrb[0].mxu0 %v225
        %v293 = vpop.f32.mrb[0].mxu0
        %v294 = vadd.f32 %v222, %v293
        %v295 = vpop.f32.mrb[0].mxu0
        %296 = vdwg.mxu0
        %297 = vadd.xlane.f32.xlu0 %v294
        %v298 = vpop.xlane.xlu0 %297
        %v299 = vmul.f32 %v298, 0.015625
        %v300 = vsub.f32 %v294, %v299
        %v301 = vlaneseq
        %v302 = vshrl.u32 %v301, 7
        %v303 = vsub.s32 3, %v302
        %v304 = vrot.slane %v218, %v303
        %v305 = vmul.f32 %v300, %v304
        %v306 = vmul.f32 %v305, %v305
        %307 = vadd.xlane.f32.xlu0 %v306
        %v308 = vpop.xlane.xlu0 %307
        %v309 = vmul.f32 %v308, 0.015625
        %v310 = vadd.f32 %v309, 1e-12
        %v311 = vrsqrt.pop %v310
        %v312 = vmul.f32 %v305, %v311
        %v313 = vlaneseq
        %v314 = vshrl.u32 %v313, 7
        %v315 = vsub.s32 1, %v314
        %v316 = vrot.slane %v218, %v315
        %v317 = vmul.f32 %v312, %v316
        %v318 = vlaneseq
        %v319 = vshrl.u32 %v318, 7
        %v320 = vsub.s32 2, %v319
        %v321 = vrot.slane %v218, %v320
        %v322 = vadd.f32 %v317, %v321
        %323 = vst [vmem:[%s212] sm:$0xff] %v322
        %s324 = sand.u32 %s97, 1
        %s325 = scalar_lea.sflag [#allocation4], %s324
        %s326 = sand.u32 %s97, 1
        %s327 = smul.addr %s326, 8
        %s328 = scalar_lea.vmem [#allocation8], %s327
        // Predicated region
        $region45: #{tpu_custom_call.1} parent=31 // pred_check
          %p329 = pneg %p107
        $region46: #{tpu_custom_call.1} parent=31 // pred_check_branch
          %331 = sbr.rel (%p329) target = $region48
        $region47: #{tpu_custom_call.1} parent=31 // pred_region
          %s333 = ssub.s32 128, 128
          %334 = vsyncadd %s325, %s333
          %s335 = smul.addr %s21, 128
          %s336 = scalar_lea.hbm %s3, %s335
          %s338 = sshll.u32 %s328, 4
          %s339 = int_to_ptr.vmem [resolvable:$true] %s338
          %341 = dma.vmem_to_hbm [thread:$0]  %s339, 128, %s336, %s325
        $region48: #{tpu_custom_call.1} parent=31 // pred_fallthru
          _
      $region32: #{tpu_custom_call.1} parent=5 // pred_fallthru
        _
      %p342 = scmp.le.s32.totalorder 2, %s16
      // Predicated region
      $region49: #{tpu_custom_call.1} parent=5 // pred_check
        %p343 = pneg %p342
      $region50: #{tpu_custom_call.1} parent=5 // pred_check_branch
        %345 = sbr.rel (%p343) target = $region52
      $region51: #{tpu_custom_call.1} parent=5 // pred_region
        %s346 = ssub.s32 %s16, 2
        // Predicated region
        $region53: #{tpu_custom_call.1} parent=51 // pred_check
          %p347 = pneg %p113
        $region54: #{tpu_custom_call.1} parent=51 // pred_check_branch
          %349 = sbr.rel (%p347) target = $region56
        $region55: #{tpu_custom_call.1} parent=51 // pred_region
          %s350 = sand.u32 %s98, 1
          %s351 = scalar_lea.sflag [#allocation4], %s350
          %s352 = sand.u32 %s98, 1
          %s353 = smul.addr %s352, 8
          %s354 = scalar_lea.vmem [#allocation8], %s353
          %355 = dma.done %s351, 128
        $region56: #{tpu_custom_call.1} parent=51 // pred_fallthru
          _
      $region52: #{tpu_custom_call.1} parent=5 // pred_fallthru
        _
    $region6: #{tpu_custom_call.1} parent=1 // loop_footer
      %s20 = sadd.s32 1, %s16
    $region7: #{tpu_custom_call.1} parent=1 // loop_footer_branch
      %15 = sbr.rel target = $region3
    $region8: #{tpu_custom_call.1} parent=1 // loop_exit
      _
    %356 = vsyncpa [#allocation3], 1
    %s357 = scalar_lea.sflag [#allocation3], 1
    %358 = vsyncpa %s357, 1
    %359 = vsyncpa [#allocation6], 1
    %360 = vsyncpa [#allocation4], 1
    %s361 = scalar_lea.sflag [#allocation4], 1
    %362 = vsyncpa %s361, 1

// kernel: tpu_custom_call.1
$region0: #{tpu_custom_call.1}
  #allocation0 [shape = 'u32[]', space=smem, size = 0x4, offset = 0x4, fixed_abs, tag = 'smem constant byte address 0x4 - core index']
  #allocation1 [shape = 'u32[144,128]{1,0:T(1,128)}', space=vmem, size = 0x12000, scoped, tag = 'internal scratch']
  %s0 = inlined_call_operand.hbm [shape: f32[18,32], index: 0, kind: input, shape index: {}]
  %s1 = inlined_call_operand.hbm [shape: f32[32,128], index: 1, kind: input, shape index: {}]
  %s2 = inlined_call_operand.hbm [shape: f32[4,128], index: 2, kind: input, shape index: {}]
  %s3 = inlined_call_operand.hbm [shape: f32[18,128], index: 3, kind: output, shape index: {}]
  %s4 = sld [smem:[#allocation0]]
  $region57: #{tpu_custom_call.1} parent=0
    _
  %s6 = ssub.s32 1, %s4
  %s7 = scalar_select 0, %s6, %s4
  $region1: #{tpu_custom_call.1} parent=0
    #allocation2 [shape = 'u8[8192]{0}', space=vmem, size = 0x2000, scoped, tag = 'input window, operand 0']
    #allocation3 [shape = 's32[2]{0}', space=sflag, size = 0x8, scoped, tag = 'scoped memory for tpu_custom_call.1']
    #allocation4 [shape = 's32[2]{0}', space=sflag, size = 0x8, scoped, tag = 'scoped memory for tpu_custom_call.1']
    #allocation5 [shape = 'u8[16384]{0}', space=vmem, size = 0x4000, scoped, tag = 'input window, operand 1, single buffered']
    #allocation6 [shape = 's32[1]{0}', space=sflag, size = 0x4, scoped, tag = 'scoped memory for tpu_custom_call.1']
    #allocation7 [shape = 'u8[2048]{0}', space=vmem, size = 0x800, scoped, tag = 'input window, operand 2, single buffered']
    #allocation8 [shape = 'u8[8192]{0}', space=vmem, size = 0x2000, scoped, tag = 'output window, operand 0']
    %8 = vsyncpa [#allocation3], 0
    %s9 = scalar_lea.sflag [#allocation3], 1
    %10 = vsyncpa %s9, 0
    %11 = vsyncpa [#allocation6], 0
    %12 = vsyncpa [#allocation4], 0
    %s13 = scalar_lea.sflag [#allocation4], 1
    %14 = vsyncpa %s13, 0
    loop: start=0, step=1, limit=5
    $region2: #{tpu_custom_call.1} parent=1 // loop_pre_header
      _
    $region3: #{tpu_custom_call.1} parent=1 // loop_header
      %s16 = sphi 0, %s20
      %p17 = scmp.ge.s32.totalorder %s16, 5
      %s26 = sphi 0, %s28
      %s29 = sphi 0, %s26
      %s30 = sphi 0, %s29
      %s46 = sphi 0, %s30
      %s50 = sphi 0, %s50
      %s52 = sphi 0, %s50
      %s53 = sphi 0, %s52
      %s67 = sphi 0, %s53
      %s71 = sphi 0, %s71
      %s73 = sphi 0, %s71
      %s74 = sphi 0, %s73
      %s88 = sphi 0, %s74
      %s94 = sphi 0, %s96
      %s97 = sphi 0, %s94
      %s98 = sphi 0, %s97
      %s114 = sphi 0, %s98
    $region4: #{tpu_custom_call.1} parent=1 // loop_header_branch
      %19 = sbr.rel (%p17) target = $region8
    $region5: #{tpu_custom_call.1} parent=1 // loop_body
      %s21 = ssub.s32 %s16, 1
      %s22 = ssub.s32 %s16, 2
      %s23 = sadd.s32 %s16, 1
      %s24 = ssub.s32 %s16, %s23
      %p25 = scmp.eq.s32.totalorder %s24, 0
      %s27 = sadd.s32 %s26, 1
      %s28 = scalar_select %p25, %s26, %s27
      %p31 = pneg %p25
      %p32 = scmp.eq.s32.totalorder %s16, 2
      %p33 = por %p31, %p32
      %p34 = scmp.ne.s32.totalorder %s26, %s29
      %p35 = scmp.eq.s32.totalorder %s16, 0
      %p36 = por %p34, %p35
      %p37 = scmp.ne.s32.totalorder %s26, %s29
      %p38 = scmp.eq.s32.totalorder %s21, 2
      %p39 = por %p37, %p38
      %p40 = scmp.ne.s32.totalorder %s29, %s30
      %p41 = scmp.eq.s32.totalorder %s21, 0
      %p42 = por %p40, %p41
      %p43 = scmp.ne.s32.totalorder %s29, %s30
      %p44 = scmp.eq.s32.totalorder %s22, 2
      %p45 = por %p43, %p44
      %p47 = scmp.ne.s32.totalorder %s30, %s46
      %p48 = scmp.eq.s32.totalorder %s22, 0
      %p49 = por %p47, %p48
      %s51 = sadd.s32 %s50, 1
      %p54 = scmp.eq.s32.totalorder %s16, 2
      %p55 = scmp.ne.s32.totalorder %s50, %s52
      %p56 = scmp.eq.s32.totalorder %s16, 0
      %p57 = por %p55, %p56
      %p58 = scmp.ne.s32.totalorder %s50, %s52
      %p59 = scmp.eq.s32.totalorder %s21, 2
      %p60 = por %p58, %p59
      %p61 = scmp.ne.s32.totalorder %s52, %s53
      %p62 = scmp.eq.s32.totalorder %s21, 0
      %p63 = por %p61, %p62
      %p64 = scmp.ne.s32.totalorder %s52, %s53
      %p65 = scmp.eq.s32.totalorder %s22, 2
      %p66 = por %p64, %p65
      %p68 = scmp.ne.s32.totalorder %s53, %s67
      %p69 = scmp.eq.s32.totalorder %s22, 0
      %p70 = por %p68, %p69
      %s72 = sadd.s32 %s71, 1
      %p75 = scmp.eq.s32.totalorder %s16, 2
      %p76 = scmp.ne.s32.totalorder %s71, %s73
      %p77 = scmp.eq.s32.totalorder %s16, 0
      %p78 = por %p76, %p77
      %p79 = scmp.ne.s32.totalorder %s71, %s73
      %p80 = scmp.eq.s32.totalorder %s21, 2
      %p81 = por %p79, %p80
      %p82 = scmp.ne.s32.totalorder %s73, %s74
      %p83 = scmp.eq.s32.totalorder %s21, 0
      %p84 = por %p82, %p83
      %p85 = scmp.ne.s32.totalorder %s73, %s74
      %p86 = scmp.eq.s32.totalorder %s22, 2
      %p87 = por %p85, %p86
      %p89 = scmp.ne.s32.totalorder %s74, %s88
      %p90 = scmp.eq.s32.totalorder %s22, 0
      %p91 = por %p89, %p90
      %s92 = ssub.s32 %s16, %s23
      %p93 = scmp.eq.s32.totalorder %s92, 0
      %s95 = sadd.s32 %s94, 1
      %s96 = scalar_select %p93, %s94, %s95
      %p99 = pneg %p93
      %p100 = scmp.eq.s32.totalorder %s16, 2
      %p101 = por %p99, %p100
      %p102 = scmp.ne.s32.totalorder %s94, %s97
      %p103 = scmp.eq.s32.totalorder %s16, 0
      %p104 = por %p102, %p103
      %p105 = scmp.ne.s32.totalorder %s94, %s97
      %p106 = scmp.eq.s32.totalorder %s21, 2
      %p107 = por %p105, %p106
      %p108 = scmp.ne.s32.totalorder %s97, %s98
      %p109 = scmp.eq.s32.totalorder %s21, 0
      %p110 = por %p108, %p109
      %p111 = scmp.ne.s32.totalorder %s97, %s98
      %p112 = scmp.eq.s32.totalorder %s22, 2
      %p113 = por %p111, %p112
      %p115 = scmp.ne.s32.totalorder %s98, %s114
      %p116 = scmp.eq.s32.totalorder %s22, 0
      %p117 = por %p115, %p116
      %p118 = scmp.le.s32.totalorder 1, %s16
      %p119 = scmp.lt.s32.totalorder %s16, 4
      %p120 = pnand %p118, %p119
      %p121 = pneg %p120
      // Predicated region
      $region9: #{tpu_custom_call.1} parent=5 // pred_check
        _
      $region10: #{tpu_custom_call.1} parent=5 // pred_check_branch
        %123 = sbr.rel (%p120) target = $region12
      $region11: #{tpu_custom_call.1} parent=5 // pred_region
        %s124 = ssub.s32 %s16, 1
        // Predicated region
        $region13: #{tpu_custom_call.1} parent=11 // pred_check
          %p125 = pneg %p63
        $region14: #{tpu_custom_call.1} parent=11 // pred_check_branch
          %127 = sbr.rel (%p125) target = $region16
        $region15: #{tpu_custom_call.1} parent=11 // pred_region
          %s129 = ssub.s32 512, 512
          %130 = vsyncadd [#allocation6], %s129
          %s131 = sshll.u32 [#allocation5], 4
          %s132 = int_to_ptr.vmem [resolvable:$true] %s131
          %137 = dma.hbm_to_vmem [thread:$0]  %s1, 512, %s132, [#allocation6], 128, 128, 8
        $region16: #{tpu_custom_call.1} parent=11 // pred_fallthru
          _
        // Predicated region
        $region17: #{tpu_custom_call.1} parent=11 // pred_check
          %p138 = pneg %p84
        $region18: #{tpu_custom_call.1} parent=11 // pred_check_branch
          %140 = sbr.rel (%p138) target = $region20
        $region19: #{tpu_custom_call.1} parent=11 // pred_region
          %s142 = ssub.s32 64, 64
          %143 = vsyncadd [#allocation6], %s142
          %s145 = sshll.u32 [#allocation7], 4
          %s146 = int_to_ptr.vmem [resolvable:$true] %s145
          %148 = dma.hbm_to_vmem [thread:$0]  %s2, 64, %s146, [#allocation6]
        $region20: #{tpu_custom_call.1} parent=11 // pred_fallthru
          _
      $region12: #{tpu_custom_call.1} parent=5 // pred_fallthru
        _
      %p149 = scmp.lt.s32.totalorder %s16, 3
      // Predicated region
      $region21: #{tpu_custom_call.1} parent=5 // pred_check
        %p150 = pneg %p149
      $region22: #{tpu_custom_call.1} parent=5 // pred_check_branch
        %152 = sbr.rel (%p150) target = $region24
      $region23: #{tpu_custom_call.1} parent=5 // pred_region
        // Predicated region
        $region25: #{tpu_custom_call.1} parent=23 // pred_check
          %p153 = pneg %p36
        $region26: #{tpu_custom_call.1} parent=23 // pred_check_branch
          %155 = sbr.rel (%p153) target = $region28
        $region27: #{tpu_custom_call.1} parent=23 // pred_region
          %s156 = sand.u32 %s26, 1
          %s157 = scalar_lea.sflag [#allocation3], %s156
          %s158 = sand.u32 %s26, 1
          %s159 = smul.addr %s158, 8
          %s160 = scalar_lea.vmem [#allocation2], %s159
          %s162 = ssub.s32 128, 128
          %163 = vsyncadd %s157, %s162
          %s164 = smul.addr %s16, 128
          %s165 = scalar_lea.hbm %s0, %s164
          %s167 = sshll.u32 %s160, 4
          %s168 = int_to_ptr.vmem [resolvable:$true] %s167
          %170 = dma.hbm_to_vmem [thread:$0]  %s165, 128, %s168, %s157
        $region28: #{tpu_custom_call.1} parent=23 // pred_fallthru
          _
      $region24: #{tpu_custom_call.1} parent=5 // pred_fallthru
        _
      %p171 = scmp.le.s32.totalorder 1, %s16
      %p172 = scmp.lt.s32.totalorder %s16, 4
      %p173 = pnand %p171, %p172
      %p174 = pneg %p173
      // Predicated region
      $region29: #{tpu_custom_call.1} parent=5 // pred_check
        _
      $region30: #{tpu_custom_call.1} parent=5 // pred_check_branch
        %176 = sbr.rel (%p173) target = $region32
      $region31: #{tpu_custom_call.1} parent=5 // pred_region
        %s177 = ssub.s32 %s16, 1
        %s178 = sand.u32 %s29, 1
        %s179 = scalar_lea.sflag [#allocation3], %s178
        %s180 = sand.u32 %s29, 1
        %s181 = smul.addr %s180, 8
        %s182 = scalar_lea.vmem [#allocation2], %s181
        // Predicated region
        $region33: #{tpu_custom_call.1} parent=31 // pred_check
          %p183 = pneg %p42
        $region34: #{tpu_custom_call.1} parent=31 // pred_check_branch
          %185 = sbr.rel (%p183) target = $region36
        $region35: #{tpu_custom_call.1} parent=31 // pred_region
          %186 = dma.done %s179, 128
        $region36: #{tpu_custom_call.1} parent=31 // pred_fallthru
          _
        // Predicated region
        $region37: #{tpu_custom_call.1} parent=31 // pred_check
          %p187 = pneg %p63
        $region38: #{tpu_custom_call.1} parent=31 // pred_check_branch
          %189 = sbr.rel (%p187) target = $region40
        $region39: #{tpu_custom_call.1} parent=31 // pred_region
          %190 = dma.done [#allocation6], 512
        $region40: #{tpu_custom_call.1} parent=31 // pred_fallthru
          _
        // Predicated region
        $region41: #{tpu_custom_call.1} parent=31 // pred_check
          %p191 = pneg %p84
        $region42: #{tpu_custom_call.1} parent=31 // pred_check_branch
          %193 = sbr.rel (%p191) target = $region44
        $region43: #{tpu_custom_call.1} parent=31 // pred_region
          %194 = dma.done [#allocation6], 64
        $region44: #{tpu_custom_call.1} parent=31 // pred_fallthru
          _
        %s195 = sand.u32 %s29, 1
        %s196 = scalar_lea.sflag [#allocation3], %s195
        %s197 = sand.u32 %s29, 1
        %s198 = smul.addr %s197, 8
        %s199 = scalar_lea.vmem [#allocation2], %s198
        %p200 = pneg %p42
        %p201 = pneg %p39
        %p202 = pneg %p63
        %p203 = pneg %p60
        %p204 = pneg %p84
        %p205 = pneg %p81
        %p206 = pneg %p110
        %p207 = pneg %p107
        %s208 = sand.u32 %s97, 1
        %s209 = scalar_lea.sflag [#allocation4], %s208
        %s210 = sand.u32 %s97, 1
        %s211 = smul.addr %s210, 8
        %s212 = scalar_lea.vmem [#allocation8], %s211
        %v213 = vld [vmem:[%s182] sm:$0xff]
        %v214 = vld [vmem:[#allocation5] sm:$0xff]
        %v215 = vld [vmem:[#allocation5 + $0x8] sm:$0xff]
        %v216 = vld [vmem:[#allocation5 + $0x10] sm:$0xff]
        %v217 = vld [vmem:[#allocation5 + $0x18] sm:$0xff]
        %v218 = vld [vmem:[#allocation7] sm:$0xf]
        %v219 = vlaneseq
        %v220 = vshrl.u32 %v219, 7
        %v221 = vsub.s32 0, %v220
        %v222 = vrot.slane %v218, %v221
        %vm223 = vcmask 261120
        %v225 = vsel %vm223, %v213, 0
        %227 = vmatprep.subr.mxu0 0.0
        %228 = vmatpush1.msra.mxu0 %v214
        %229 = vmatprep.subr.mxu0 0.0
        %230 = vmatpush1.msra.mxu0 %v215
        %231 = vmatprep.subr.mxu0 0.0
        %232 = vmatpush1.msra.mxu0 %v216
        %233 = vmatprep.subr.mxu0 0.0
        %234 = vmatpush1.msra.mxu0 %v217
        %235 = vmatprep.subr.mxu0 0.0
        %236 = vmatpush1.msra.mxu0 0.0
        %237 = vmatprep.subr.mxu0 0.0
        %238 = vmatpush1.msra.mxu0 0.0
        %239 = vmatprep.subr.mxu0 0.0
        %240 = vmatpush1.msra.mxu0 0.0
        %241 = vmatprep.subr.mxu0 0.0
        %242 = vmatpush1.msra.mxu0 0.0
        %243 = vmatprep.subr.mxu0 0.0
        %244 = vmatpush1.msra.mxu0 0.0
        %245 = vmatprep.subr.mxu0 0.0
        %246 = vmatpush1.msra.mxu0 0.0
        %247 = vmatprep.subr.mxu0 0.0
        %248 = vmatpush1.msra.mxu0 0.0
        %249 = vmatprep.subr.mxu0 0.0
        %250 = vmatpush1.msra.mxu0 0.0
        %251 = vmatprep.subr.mxu0 0.0
        %252 = vmatpush1.msra.mxu0 0.0
        %253 = vmatprep.subr.mxu0 0.0
        %254 = vmatpush1.msra.mxu0 0.0
        %255 = vmatprep.subr.mxu0 0.0
        %256 = vmatpush1.msra.mxu0 0.0
        %257 = vmatprep.subr.mxu0 0.0
        %258 = vmatpush1.msra.mxu0 0.0
        %259 = vmatprep.subr.mxu0 0.0
        %260 = vmatpush1.msra.mxu0 0.0
        %261 = vmatprep.subr.mxu0 0.0
        %262 = vmatpush1.msra.mxu0 0.0
        %263 = vmatprep.subr.mxu0 0.0
        %264 = vmatpush1.msra.mxu0 0.0
        %265 = vmatprep.subr.mxu0 0.0
        %266 = vmatpush1.msra.mxu0 0.0
        %267 = vmatprep.subr.mxu0 0.0
        %268 = vmatpush1.msra.mxu0 0.0
        %269 = vmatprep.subr.mxu0 0.0
        %270 = vmatpush1.msra.mxu0 0.0
        %271 = vmatprep.subr.mxu0 0.0
        %272 = vmatpush1.msra.mxu0 0.0
        %273 = vmatprep.subr.mxu0 0.0
        %274 = vmatpush1.msra.mxu0 0.0
        %275 = vmatprep.subr.mxu0 0.0
        %276 = vmatpush1.msra.mxu0 0.0
        %277 = vmatprep.subr.mxu0 0.0
        %278 = vmatpush1.msra.mxu0 0.0
        %279 = vmatprep.subr.mxu0 0.0
        %280 = vmatpush1.msra.mxu0 0.0
        %281 = vmatprep.subr.mxu0 0.0
        %282 = vmatpush1.msra.mxu0 0.0
        %283 = vmatprep.subr.mxu0 0.0
        %284 = vmatpush1.msra.mxu0 0.0
        %285 = vmatprep.subr.mxu0 0.0
        %286 = vmatpush1.msra.mxu0 0.0
        %287 = vmatprep.subr.mxu0 0.0
        %288 = vmatpush1.msra.mxu0 0.0
        %289 = vmatprep.subr.mxu0 0.0
        %290 = vmatpush1.msra.mxu0 0.0
        %291 = vmatprep.mubr.f32.mxu0 0.0
        %292 = vmatmul.mubr.f32.gmra.mrb[0].mxu0 %v225
        %v293 = vpop.f32.mrb[0].mxu0
        %v294 = vadd.f32 %v222, %v293
        %v295 = vpop.f32.mrb[0].mxu0
        %296 = vdwg.mxu0
        %297 = vadd.xlane.f32.xlu0 %v294
        %v298 = vpop.xlane.xlu0 %297
        %v299 = vmul.f32 %v298, 0.015625
        %v300 = vsub.f32 %v294, %v299
        %v301 = vlaneseq
        %v302 = vshrl.u32 %v301, 7
        %v303 = vsub.s32 3, %v302
        %v304 = vrot.slane %v218, %v303
        %v305 = vmul.f32 %v300, %v304
        %v306 = vmul.f32 %v305, %v305
        %307 = vadd.xlane.f32.xlu0 %v306
        %v308 = vpop.xlane.xlu0 %307
        %v309 = vmul.f32 %v308, 0.015625
        %v310 = vadd.f32 %v309, 1e-12
        %v311 = vrsqrt.pop %v310
        %v312 = vmul.f32 %v305, %v311
        %v313 = vlaneseq
        %v314 = vshrl.u32 %v313, 7
        %v315 = vsub.s32 1, %v314
        %v316 = vrot.slane %v218, %v315
        %v317 = vmul.f32 %v312, %v316
        %v318 = vlaneseq
        %v319 = vshrl.u32 %v318, 7
        %v320 = vsub.s32 2, %v319
        %v321 = vrot.slane %v218, %v320
        %v322 = vadd.f32 %v317, %v321
        %323 = vst [vmem:[%s212] sm:$0xff] %v322
        %s324 = sand.u32 %s97, 1
        %s325 = scalar_lea.sflag [#allocation4], %s324
        %s326 = sand.u32 %s97, 1
        %s327 = smul.addr %s326, 8
        %s328 = scalar_lea.vmem [#allocation8], %s327
        // Predicated region
        $region45: #{tpu_custom_call.1} parent=31 // pred_check
          %p329 = pneg %p107
        $region46: #{tpu_custom_call.1} parent=31 // pred_check_branch
          %331 = sbr.rel (%p329) target = $region48
        $region47: #{tpu_custom_call.1} parent=31 // pred_region
          %s333 = ssub.s32 128, 128
          %334 = vsyncadd %s325, %s333
          %s335 = smul.addr %s21, 128
          %s336 = scalar_lea.hbm %s3, %s335
          %s338 = sshll.u32 %s328, 4
          %s339 = int_to_ptr.vmem [resolvable:$true] %s338
          %341 = dma.vmem_to_hbm [thread:$0]  %s339, 128, %s336, %s325
        $region48: #{tpu_custom_call.1} parent=31 // pred_fallthru
          _
      $region32: #{tpu_custom_call.1} parent=5 // pred_fallthru
        _
      %p342 = scmp.le.s32.totalorder 2, %s16
      // Predicated region
      $region49: #{tpu_custom_call.1} parent=5 // pred_check
        %p343 = pneg %p342
      $region50: #{tpu_custom_call.1} parent=5 // pred_check_branch
        %345 = sbr.rel (%p343) target = $region52
      $region51: #{tpu_custom_call.1} parent=5 // pred_region
        %s346 = ssub.s32 %s16, 2
        // Predicated region
        $region53: #{tpu_custom_call.1} parent=51 // pred_check
          %p347 = pneg %p113
        $region54: #{tpu_custom_call.1} parent=51 // pred_check_branch
          %349 = sbr.rel (%p347) target = $region56
        $region55: #{tpu_custom_call.1} parent=51 // pred_region
          %s350 = sand.u32 %s98, 1
          %s351 = scalar_lea.sflag [#allocation4], %s350
          %s352 = sand.u32 %s98, 1
          %s353 = smul.addr %s352, 8
          %s354 = scalar_lea.vmem [#allocation8], %s353
          %355 = dma.done %s351, 128
        $region56: #{tpu_custom_call.1} parent=51 // pred_fallthru
          _
      $region52: #{tpu_custom_call.1} parent=5 // pred_fallthru
        _
    $region6: #{tpu_custom_call.1} parent=1 // loop_footer
      %s20 = sadd.s32 1, %s16
    $region7: #{tpu_custom_call.1} parent=1 // loop_footer_branch
      %15 = sbr.rel target = $region3
    $region8: #{tpu_custom_call.1} parent=1 // loop_exit
      _
    %356 = vsyncpa [#allocation3], 1
    %s357 = scalar_lea.sflag [#allocation3], 1
    %358 = vsyncpa %s357, 1
    %359 = vsyncpa [#allocation6], 1
    %360 = vsyncpa [#allocation4], 1
    %s361 = scalar_lea.sflag [#allocation4], 1
    %362 = vsyncpa %s361, 1

</llo_original>
